<compile_context>
chip_gen: v6e
topology: v6e:2x2x1
jax: 0.10.0
libtpu: 0.0.40
codegen_flags: <defaults>
</compile_context>

<pallas_src>
import functools

import jax
import jax.numpy as jnp
from jax.experimental import pallas as pl
from jax.experimental.pallas import tpu as pltpu

_LANES = 128


def _channel_attention_kernel(x_ref, w1t_ref, w2t_ref, o_ref,
                              sum_ref, max_ref, *, hw_total, hw_pad, hw_tile):
    # x_ref:   (nb, C, hw_tile)   current batch-block / spatial tile
    # w1t/w2t: (C, C)             pre-transposed 1x1-conv weights (W.T)
    # o_ref:   (nb, 1, C)         lane-dense attention output block
    # sum_ref/max_ref: (nb, C, 128) lane-parallel f32 accumulators (VMEM scratch)
    k = pl.program_id(1)

    @pl.when(k == 0)
    def _init():
        sum_ref[...] = jnp.zeros_like(sum_ref)
        max_ref[...] = jnp.full_like(max_ref, -jnp.inf)

    # Single pass over the tile in 128-lane chunks: elementwise (VPU) updates
    # of both accumulators from the same loaded chunk; the cross-lane (XLU)
    # reduction is deferred to the finalize branch.
    num_chunks = hw_tile // _LANES
    last_tile_start = hw_pad - hw_tile
    for c in range(num_chunks):
        lo = c * _LANES
        chunk = x_ref[:, :, lo:lo + _LANES].astype(jnp.float32)
        sum_ref[...] += chunk              # zero spatial padding is sum-safe
        if hw_pad != hw_total and last_tile_start + lo + _LANES > hw_total:
            # This chunk may overlap spatial padding in the LAST tile: mask the
            # padded positions to -inf for the max path only.
            pos = (k * hw_tile + lo
                   + jax.lax.broadcasted_iota(jnp.int32, chunk.shape, 2))
            chunk = jnp.where(pos < hw_total, chunk, -jnp.inf)
        max_ref[...] = jnp.maximum(max_ref[...], chunk)

    @pl.when(k == pl.num_programs(1) - 1)
    def _finalize():
        avg = jnp.sum(sum_ref[...], axis=-1) * (1.0 / hw_total)    # (nb, C)
        mx = jnp.max(max_ref[...], axis=-1)                        # (nb, C)

        w1t = w1t_ref[...].astype(jnp.float32)                     # (C_in, C_out)
        w2t = w2t_ref[...].astype(jnp.float32)

        def shared_mlp(v):                                         # fc2(relu(fc1(v)))
            h = jnp.maximum(
                jnp.dot(v, w1t, preferred_element_type=jnp.float32), 0.0)
            return jnp.dot(h, w2t, preferred_element_type=jnp.float32)

        out = jax.nn.sigmoid(shared_mlp(avg) + shared_mlp(mx))     # (nb, C)
        o_ref[...] = out[:, None, :].astype(o_ref.dtype)


def _ceil_to(a, m):
    return -(-a // m) * m


def _pick_nb(n, max_nb=8):
    """Batch rows per grid step.

    Pads N a little (<= ~12% extra rows) rather than degrading to nb=1 for
    ragged batch sizes, then ensures the 'parallel' batch axis has >= 2 blocks
    (when N >= 2) so both of v7x's TensorCores get work.
    """
    limit = n + max(1, n // 8)
    nb = 1
    for cand in range(min(max_nb, n), 0, -1):
        if _ceil_to(n, cand) <= limit:
            nb = cand
            break
    while nb > 1 and -(-n // nb) < 2:
        nb //= 2
    return nb


def _x_block_budget():
    """Byte budget for ONE x block (double-buffering is accounted by the caller)."""
    try:
        vmem_cap = int(pltpu.get_tpu_info().vmem_capacity_bytes)
    except Exception:                      # conservative fallback (v7x-sized)
        vmem_cap = 64 << 20
    # ~1/8 of physical VMEM per buffer -> 2 x-buffers use ~1/4 of VMEM:
    # v7x (64 MiB) -> 8 MiB blocks, v5e/v6e (128 MiB) -> 16 MiB blocks.
    return max(4 << 20, vmem_cap // 8)


def _pick_hw_tile(hw_pad, nb, c, itemsize, budget_bytes, max_lanes=4096):
    """Spatial tile: a multiple-of-128 divisor of hw_pad.

    Targets >= 512 lanes (>= 2 KiB contiguous HBM run per channel row) and an
    x block of roughly `budget_bytes`; lanes are capped so the in-kernel chunk
    loop stays a short static unroll.
    """
    row_bytes = max(1, nb * c * itemsize)
    target = min(max(512, budget_bytes // row_bytes), max_lanes)
    if hw_pad <= target:
        return hw_pad
    base = hw_pad // _LANES
    divisors = set()
    d = 1
    while d * d <= base:
        if base % d == 0:
            divisors.add(d * _LANES)
            divisors.add((base // d) * _LANES)
        d += 1
    divisors = sorted(divisors)
    fitting = [t for t in divisors if t <= target]
    tile = fitting[-1] if fitting else _LANES
    if tile < 512:
        # Allow a modest overshoot rather than tiny tiles / short DMA runs.
        over = [t for t in divisors
                if t >= 512 and t * row_bytes <= 2 * budget_bytes
                and t <= 2 * max_lanes]
        if over:
            tile = over[0]
    return tile


def channel_attention(x, w1, w2, *, max_nb=8):
    """x: (N, C, H, W); w1, w2: (C, C) 1x1-conv weights (no bias).

    Returns sigmoid(fc2(relu(fc1(avgpool(x)))) + fc2(relu(fc1(maxpool(x)))))
    with shape (N, C, 1, 1), matching PyTorch ChannelAttention.forward.
    """
    N, C, H, W = x.shape
    HW = H * W
    x3 = x.reshape(N, C, HW)

    nb = _pick_nb(N, max_nb)
    n_pad = _ceil_to(N, nb)
    hw_pad = _ceil_to(HW, _LANES)
    if n_pad != N or hw_pad != HW:
        # Zero padding: sums are unaffected (and divided by the real HW); the
        # max path masks spatial padding to -inf in-kernel; padded batch rows
        # are sliced away below.
        x3 = jnp.pad(x3, ((0, n_pad - N), (0, 0), (0, hw_pad - HW)))

    hw_tile = _pick_hw_tile(hw_pad, nb, C, x3.dtype.itemsize, _x_block_budget())

    # Pre-transpose so in-kernel matmuls are plain (rows, C) @ (C, C).
    w1_t = jnp.transpose(w1)
    w2_t = jnp.transpose(w2)

    grid = (n_pad // nb, hw_pad // hw_tile)    # reduction (spatial) axis last

    # Explicit VMEM accounting: double-buffered x/out blocks, resident weights
    # (double-buffered by default, but their constant index_map means they are
    # only copied once), lane-parallel accumulators, plus compiler headroom.
    x_block = nb * C * hw_tile * x3.dtype.itemsize
    w_block = C * C * w1_t.dtype.itemsize
    out_block = nb * C * x3.dtype.itemsize
    scratch = 2 * nb * C * _LANES * 4
    vmem_need = 2 * x_block + 2 * 2 * w_block + 2 * out_block + scratch + (2 << 20)
    vmem_limit = int(min(max(vmem_need, 32 << 20), 112 << 20))
    # TODO(synk): single-buffer the weight blocks (pipeline_mode=pl.Buffered(1))
    # to trim 2*C*C*itemsize once buffer_count=1 is universally supported.

    kernel = functools.partial(_channel_attention_kernel,
                               hw_total=HW, hw_pad=hw_pad, hw_tile=hw_tile)

    out = pl.pallas_call(
        kernel,
        out_shape=jax.ShapeDtypeStruct((n_pad, 1, C), x.dtype),
        grid=grid,
        in_specs=[
            pl.BlockSpec((nb, C, hw_tile), lambda n, k: (n, 0, k)),
            pl.BlockSpec((C, C), lambda n, k: (0, 0)),
            pl.BlockSpec((C, C), lambda n, k: (0, 0)),
        ],
        out_specs=pl.BlockSpec((nb, 1, C), lambda n, k: (n, 0, 0)),
        scratch_shapes=[
            pltpu.VMEM((nb, C, _LANES), jnp.float32),   # lane-parallel running sum
            pltpu.VMEM((nb, C, _LANES), jnp.float32),   # lane-parallel running max
        ],
        compiler_params=pltpu.CompilerParams(
            dimension_semantics=("parallel", "arbitrary"),
            vmem_limit_bytes=vmem_limit,
        ),
    )(x3, w1_t, w2_t)

    return out[:N, 0, :].reshape(N, C, 1, 1)


def _reference(x, w1, w2):
    # Pure-JAX reference matching the PyTorch forward exactly.
    avg = jnp.mean(x, axis=(2, 3))                  # (N, C)
    mx = jnp.max(x, axis=(2, 3))                    # (N, C)

    def mlp(v):
        return jnp.maximum(v @ w1.T, 0.0) @ w2.T

    return jax.nn.sigmoid(mlp(avg) + mlp(mx))[:, :, None, None]


if __name__ == "__main__":
    key = jax.random.PRNGKey(0)
    kx, k1, k2 = jax.random.split(key, 3)

    N, C, H, W = 2, 4, 16, 16
    x = jax.random.normal(kx, (N, C, H, W), dtype=jnp.float32)

    # Conv2d(in_planes, in_planes, 1, bias=False) weights: (C, C, 1, 1) -> (C, C)
    bound = 1.0 / (C ** 0.5)
    w1 = jax.random.uniform(k1, (C, C), jnp.float32, -bound, bound)
    w2 = jax.random.uniform(k2, (C, C), jnp.float32, -bound, bound)

    y = channel_attention(x, w1, w2)
    y = jax.block_until_ready(y)

    y_ref = _reference(x, w1, w2)
    assert y.shape == (N, C, 1, 1)
    assert bool(jnp.allclose(y, y_ref, atol=1e-5, rtol=1e-5)), "mismatch vs reference"

    print("KERNEL_OK")
</pallas_src>

<mosaic_0001>
module attributes {stable_mosaic.version = 11 : i64} {
  func.func @_channel_attention_kernel(%arg0: i32, %arg1: i32, %arg2: memref<1x4x256xf32, #tpu.memory_space<vmem>>, %arg3: memref<4x4xf32, #tpu.memory_space<vmem>>, %arg4: memref<4x4xf32, #tpu.memory_space<vmem>>, %arg5: memref<1x1x4xf32, #tpu.memory_space<vmem>>, %arg6: memref<1x4x128xf32, #tpu.memory_space<vmem>>, %arg7: memref<1x4x128xf32, #tpu.memory_space<vmem>>) attributes {dimension_semantics = [#tpu.dimension_semantics<parallel>, #tpu.dimension_semantics<arbitrary>], iteration_bounds = array<i64: 2, 1>, scalar_prefetch = 0 : i64, scratch_operands = 2 : i64, tpu.core_type = #tpu.core_type<tc>, window_params = [{transform_indices = @transform_0, window_bounds = array<i64: 1, 4, 256>}, {pipeline_mode = #tpu.pipeline_mode<synchronous>, transform_indices = @transform_1, window_bounds = array<i64: 4, 4>}, {pipeline_mode = #tpu.pipeline_mode<synchronous>, transform_indices = @transform_2, window_bounds = array<i64: 4, 4>}, {transform_indices = @transform_3, window_bounds = array<i64: 1, 1, 4>}]} {
    %c0_i32 = arith.constant 0 : i32
    %0 = arith.cmpi eq, %arg1, %c0_i32 : i32
    %1 = arith.extui %0 : i1 to i32
    %c0_i32_0 = arith.constant 0 : i32
    %2 = arith.cmpi ne, %1, %c0_i32_0 : i32
    scf.if %2 {
      %cst = arith.constant 0.000000e+00 : f32
      %20 = vector.broadcast %cst : f32 to vector<1x4x128xf32>
      %c0_31 = arith.constant 0 : index
      %c0_32 = arith.constant 0 : index
      %c0_33 = arith.constant 0 : index
      %21 = vector.load %arg6[%c0_31, %c0_32, %c0_33] : memref<1x4x128xf32, #tpu.memory_space<vmem>>, vector<1x4x128xf32>
      tpu.vector_store %arg6[%c0_31, %c0_32, %c0_33], %20 {strides = array<i32>} : memref<1x4x128xf32, #tpu.memory_space<vmem>>, vector<1x4x128xf32>,
      %cst_34 = arith.constant 0xFF800000 : f32
      %22 = vector.broadcast %cst_34 : f32 to vector<1x4x128xf32>
      %c0_35 = arith.constant 0 : index
      %c0_36 = arith.constant 0 : index
      %c0_37 = arith.constant 0 : index
      %23 = vector.load %arg7[%c0_35, %c0_36, %c0_37] : memref<1x4x128xf32, #tpu.memory_space<vmem>>, vector<1x4x128xf32>
      tpu.vector_store %arg7[%c0_35, %c0_36, %c0_37], %22 {strides = array<i32>} : memref<1x4x128xf32, #tpu.memory_space<vmem>>, vector<1x4x128xf32>,
    } else {
    }
    %c0 = arith.constant 0 : index
    %c0_1 = arith.constant 0 : index
    %c0_2 = arith.constant 0 : index
    %3 = vector.load %arg2[%c0, %c0_1, %c0_2] : memref<1x4x256xf32, #tpu.memory_space<vmem>>, vector<1x4x128xf32>
    %c0_3 = arith.constant 0 : index
    %c0_4 = arith.constant 0 : index
    %c0_5 = arith.constant 0 : index
    %4 = vector.load %arg6[%c0_3, %c0_4, %c0_5] : memref<1x4x128xf32, #tpu.memory_space<vmem>>, vector<1x4x128xf32>
    %5 = arith.addf %4, %3 : vector<1x4x128xf32>
    %c0_6 = arith.constant 0 : index
    %c0_7 = arith.constant 0 : index
    %c0_8 = arith.constant 0 : index
    %6 = vector.load %arg6[%c0_6, %c0_7, %c0_8] : memref<1x4x128xf32, #tpu.memory_space<vmem>>, vector<1x4x128xf32>
    tpu.vector_store %arg6[%c0_6, %c0_7, %c0_8], %5 {strides = array<i32>} : memref<1x4x128xf32, #tpu.memory_space<vmem>>, vector<1x4x128xf32>,
    %c0_9 = arith.constant 0 : index
    %c0_10 = arith.constant 0 : index
    %c0_11 = arith.constant 0 : index
    %7 = vector.load %arg7[%c0_9, %c0_10, %c0_11] : memref<1x4x128xf32, #tpu.memory_space<vmem>>, vector<1x4x128xf32>
    %8 = arith.maximumf %7, %3 : vector<1x4x128xf32>
    %c0_12 = arith.constant 0 : index
    %c0_13 = arith.constant 0 : index
    %c0_14 = arith.constant 0 : index
    %9 = vector.load %arg7[%c0_12, %c0_13, %c0_14] : memref<1x4x128xf32, #tpu.memory_space<vmem>>, vector<1x4x128xf32>
    tpu.vector_store %arg7[%c0_12, %c0_13, %c0_14], %8 {strides = array<i32>} : memref<1x4x128xf32, #tpu.memory_space<vmem>>, vector<1x4x128xf32>,
    %c0_15 = arith.constant 0 : index
    %c0_16 = arith.constant 0 : index
    %c128 = arith.constant 128 : index
    %10 = vector.load %arg2[%c0_15, %c0_16, %c128] : memref<1x4x256xf32, #tpu.memory_space<vmem>>, vector<1x4x128xf32>
    %c0_17 = arith.constant 0 : index
    %c0_18 = arith.constant 0 : index
    %c0_19 = arith.constant 0 : index
    %11 = vector.load %arg6[%c0_17, %c0_18, %c0_19] : memref<1x4x128xf32, #tpu.memory_space<vmem>>, vector<1x4x128xf32>
    %12 = arith.addf %11, %10 : vector<1x4x128xf32>
    %c0_20 = arith.constant 0 : index
    %c0_21 = arith.constant 0 : index
    %c0_22 = arith.constant 0 : index
    %13 = vector.load %arg6[%c0_20, %c0_21, %c0_22] : memref<1x4x128xf32, #tpu.memory_space<vmem>>, vector<1x4x128xf32>
    tpu.vector_store %arg6[%c0_20, %c0_21, %c0_22], %12 {strides = array<i32>} : memref<1x4x128xf32, #tpu.memory_space<vmem>>, vector<1x4x128xf32>,
    %c0_23 = arith.constant 0 : index
    %c0_24 = arith.constant 0 : index
    %c0_25 = arith.constant 0 : index
    %14 = vector.load %arg7[%c0_23, %c0_24, %c0_25] : memref<1x4x128xf32, #tpu.memory_space<vmem>>, vector<1x4x128xf32>
    %15 = arith.maximumf %14, %10 : vector<1x4x128xf32>
    %c0_26 = arith.constant 0 : index
    %c0_27 = arith.constant 0 : index
    %c0_28 = arith.constant 0 : index
    %16 = vector.load %arg7[%c0_26, %c0_27, %c0_28] : memref<1x4x128xf32, #tpu.memory_space<vmem>>, vector<1x4x128xf32>
    tpu.vector_store %arg7[%c0_26, %c0_27, %c0_28], %15 {strides = array<i32>} : memref<1x4x128xf32, #tpu.memory_space<vmem>>, vector<1x4x128xf32>,
    %c0_i32_29 = arith.constant 0 : i32
    %17 = arith.cmpi eq, %arg1, %c0_i32_29 : i32
    %18 = arith.extui %17 : i1 to i32
    %c0_i32_30 = arith.constant 0 : i32
    %19 = arith.cmpi ne, %18, %c0_i32_30 : i32
    scf.if %19 {
      %c0_31 = arith.constant 0 : index
      %c0_32 = arith.constant 0 : index
      %c0_33 = arith.constant 0 : index
      %20 = vector.load %arg6[%c0_31, %c0_32, %c0_33] : memref<1x4x128xf32, #tpu.memory_space<vmem>>, vector<1x4x128xf32>
      %cst = arith.constant dense<0.000000e+00> : vector<1x4xf32>
      %21 = vector.multi_reduction <add>, %20, %cst [2] : vector<1x4x128xf32> to vector<1x4xf32>
      %cst_34 = arith.constant 3.906250e-03 : f32
      %22 = vector.broadcast %cst_34 : f32 to vector<1x4xf32>
      %23 = arith.mulf %21, %22 : vector<1x4xf32>
      %c0_35 = arith.constant 0 : index
      %c0_36 = arith.constant 0 : index
      %c0_37 = arith.constant 0 : index
      %24 = vector.load %arg7[%c0_35, %c0_36, %c0_37] : memref<1x4x128xf32, #tpu.memory_space<vmem>>, vector<1x4x128xf32>
      %cst_38 = arith.constant dense<0xFF800000> : vector<1x4xf32>
      %25 = vector.multi_reduction <maximumf>, %24, %cst_38 [2] : vector<1x4x128xf32> to vector<1x4xf32>
      %c0_39 = arith.constant 0 : index
      %c0_40 = arith.constant 0 : index
      %26 = vector.load %arg3[%c0_39, %c0_40] : memref<4x4xf32, #tpu.memory_space<vmem>>, vector<4x4xf32>
      %c0_41 = arith.constant 0 : index
      %c0_42 = arith.constant 0 : index
      %27 = vector.load %arg4[%c0_41, %c0_42] : memref<4x4xf32, #tpu.memory_space<vmem>>, vector<4x4xf32>
      %cst_43 = arith.constant dense<0.000000e+00> : vector<1x4xf32>
      %28 = tpu.matmul %23, %26, %cst_43 {dimension_numbers = #tpu.dot_dimension_numbers<[1], [0], [0], [1], [0, 0, 1, 1], [], []>} : vector<1x4xf32>, vector<4x4xf32>, vector<1x4xf32> -> vector<1x4xf32>
      %cst_44 = arith.constant 0.000000e+00 : f32
      %29 = vector.broadcast %cst_44 : f32 to vector<1x4xf32>
      %30 = arith.maximumf %28, %29 : vector<1x4xf32>
      %cst_45 = arith.constant dense<0.000000e+00> : vector<1x4xf32>
      %31 = tpu.matmul %30, %27, %cst_45 {dimension_numbers = #tpu.dot_dimension_numbers<[1], [0], [0], [1], [0, 0, 1, 1], [], []>} : vector<1x4xf32>, vector<4x4xf32>, vector<1x4xf32> -> vector<1x4xf32>
      %cst_46 = arith.constant dense<0.000000e+00> : vector<1x4xf32>
      %32 = tpu.matmul %25, %26, %cst_46 {dimension_numbers = #tpu.dot_dimension_numbers<[1], [0], [0], [1], [0, 0, 1, 1], [], []>} : vector<1x4xf32>, vector<4x4xf32>, vector<1x4xf32> -> vector<1x4xf32>
      %cst_47 = arith.constant 0.000000e+00 : f32
      %33 = vector.broadcast %cst_47 : f32 to vector<1x4xf32>
      %34 = arith.maximumf %32, %33 : vector<1x4xf32>
      %cst_48 = arith.constant dense<0.000000e+00> : vector<1x4xf32>
      %35 = tpu.matmul %34, %27, %cst_48 {dimension_numbers = #tpu.dot_dimension_numbers<[1], [0], [0], [1], [0, 0, 1, 1], [], []>} : vector<1x4xf32>, vector<4x4xf32>, vector<1x4xf32> -> vector<1x4xf32>
      %36 = arith.addf %31, %35 : vector<1x4xf32>
      %37 = arith.negf %36 : vector<1x4xf32>
      %38 = math.exp %37 : vector<1x4xf32>
      %cst_49 = arith.constant 1.000000e+00 : f32
      %39 = vector.broadcast %cst_49 : f32 to vector<1x4xf32>
      %40 = arith.addf %39, %38 : vector<1x4xf32>
      %41 = arith.divf %39, %40 : vector<1x4xf32>
      %42 = vector.shape_cast %41 : vector<1x4xf32> to vector<1x1x4xf32>
      %c0_50 = arith.constant 0 : index
      %c0_51 = arith.constant 0 : index
      %c0_52 = arith.constant 0 : index
      %43 = vector.load %arg5[%c0_50, %c0_51, %c0_52] : memref<1x1x4xf32, #tpu.memory_space<vmem>>, vector<1x1x4xf32>
      tpu.vector_store %arg5[%c0_50, %c0_51, %c0_52], %42 {strides = array<i32>} : memref<1x1x4xf32, #tpu.memory_space<vmem>>, vector<1x1x4xf32>,
    } else {
    }
    return
  }
  func.func @transform_0(%arg0: i32, %arg1: i32) -> (i32, i32, i32) {
    %c0_i32 = arith.constant 0 : i32
    %c0_i32_0 = arith.constant 0 : i32
    return %arg0, %c0_i32, %arg1 : i32, i32, i32
  }
  func.func @transform_1(%arg0: i32, %arg1: i32) -> (i32, i32) {
    %c0_i32 = arith.constant 0 : i32
    %c0_i32_0 = arith.constant 0 : i32
    %c0_i32_1 = arith.constant 0 : i32
    return %c0_i32, %c0_i32_0 : i32, i32
  }
  func.func @transform_2(%arg0: i32, %arg1: i32) -> (i32, i32) {
    %c0_i32 = arith.constant 0 : i32
    %c0_i32_0 = arith.constant 0 : i32
    %c0_i32_1 = arith.constant 0 : i32
    return %c0_i32, %c0_i32_0 : i32, i32
  }
  func.func @transform_3(%arg0: i32, %arg1: i32) -> (i32, i32, i32) {
    %c0_i32 = arith.constant 0 : i32
    %c0_i32_0 = arith.constant 0 : i32
    %c0_i32_1 = arith.constant 0 : i32
    return %arg0, %c0_i32, %c0_i32_0 : i32, i32, i32
  }
}

</mosaic_0001>

<llo_original>
// kernel: tpu_custom_call.1
$region0: #{tpu_custom_call.1}
  #allocation0 [shape = 'u32[]', space=smem, size = 0x4, offset = 0x4, fixed_abs, tag = 'smem constant byte address 0x4 - core index']
  #allocation1 [shape = 'u32[144,128]{1,0:T(1,128)}', space=vmem, size = 0x12000, scoped, tag = 'internal scratch']
  #allocation2 [shape = 'f32[1,4,128]{2,1,0:T(4,128)}', space=vmem, size = 0x800, scoped, tag = 'scratch operand']
  #allocation3 [shape = 'f32[1,4,128]{2,1,0:T(4,128)}', space=vmem, size = 0x800, scoped, tag = 'scratch operand']
  %s0 = inlined_call_operand.hbm [shape: f32[2,4,256], index: 0, kind: input, shape index: {}]
  %s1 = inlined_call_operand.hbm [shape: f32[4,4], index: 1, kind: input, shape index: {}]
  %s2 = inlined_call_operand.hbm [shape: f32[4,4], index: 2, kind: input, shape index: {}]
  %s3 = inlined_call_operand.hbm [shape: f32[2,1,4], index: 3, kind: output, shape index: {}]
  %s4 = sld [smem:[#allocation0]]
  $region65: #{tpu_custom_call.1} parent=0
    _
  %s6 = ssub.s32 1, %s4
  %s7 = scalar_select 0, %s6, %s4
  $region1: #{tpu_custom_call.1} parent=0
    #allocation4 [shape = 'u8[8192]{0}', space=vmem, size = 0x2000, scoped, tag = 'input window, operand 0']
    #allocation5 [shape = 's32[2]{0}', space=sflag, size = 0x8, scoped, tag = 'scoped memory for tpu_custom_call.1']
    #allocation6 [shape = 's32[2]{0}', space=sflag, size = 0x8, scoped, tag = 'scoped memory for tpu_custom_call.1']
    #allocation7 [shape = 'u8[2048]{0}', space=vmem, size = 0x800, scoped, tag = 'input window, operand 1, single buffered']
    #allocation8 [shape = 's32[1]{0}', space=sflag, size = 0x4, scoped, tag = 'scoped memory for tpu_custom_call.1']
    #allocation9 [shape = 'u8[2048]{0}', space=vmem, size = 0x800, scoped, tag = 'input window, operand 2, single buffered']
    #allocation10 [shape = 'u8[1024]{0}', space=vmem, size = 0x400, scoped, tag = 'output window, operand 0']
    %8 = vsyncpa [#allocation5], 0
    %s9 = scalar_lea.sflag [#allocation5], 1
    %10 = vsyncpa %s9, 0
    %11 = vsyncpa [#allocation8], 0
    %12 = vsyncpa [#allocation6], 0
    %s13 = scalar_lea.sflag [#allocation6], 1
    %14 = vsyncpa %s13, 0
    loop: start=0, step=1, limit=4
    $region2: #{tpu_custom_call.1} parent=1 // loop_pre_header
      _
    $region3: #{tpu_custom_call.1} parent=1 // loop_header
      %s16 = sphi 0, %s20
      %p17 = scmp.ge.s32.totalorder %s16, 4
      %s23 = sphi 0, %s35
      %s24 = sphi 0, %s31
      %s25 = sphi 0, %s23
      %s26 = sphi 0, %s24
      %s27 = sphi 0, %s25
      %s28 = sphi 0, %s26
      %s40 = sphi 0, %s42
      %s43 = sphi 0, %s40
      %s44 = sphi 0, %s43
      %s60 = sphi 0, %s44
      %s64 = sphi 0, %s64
      %s66 = sphi 0, %s64
      %s67 = sphi 0, %s66
      %s81 = sphi 0, %s67
      %s85 = sphi 0, %s85
      %s87 = sphi 0, %s85
      %s88 = sphi 0, %s87
      %s102 = sphi 0, %s88
      %s108 = sphi 0, %s110
      %s111 = sphi 0, %s108
      %s112 = sphi 0, %s111
      %s128 = sphi 0, %s112
    $region4: #{tpu_custom_call.1} parent=1 // loop_header_branch
      %19 = sbr.rel (%p17) target = $region8
    $region5: #{tpu_custom_call.1} parent=1 // loop_body
      %s21 = ssub.s32 %s16, 1
      %s22 = ssub.s32 %s16, 2
      %s29 = sadd.s32 1, %s24
      %p30 = scmp.ge.s32.totalorder %s29, 1
      %s31 = scalar_select %p30, 0, %s29
      %s32 = sadd.s32 1, %s23
      %s33 = scalar_select %p30, %s32, %s23
      %p34 = scmp.ge.s32.totalorder %s33, 2
      %s35 = scalar_select %p34, 0, %s33
      %s36 = ssub.s32 %s23, %s35
      %s37 = ssub.s32 %s24, %s31
      %s38 = sor.u32 %s36, %s37
      %p39 = scmp.eq.s32.totalorder %s38, 0
      %s41 = sadd.s32 %s40, 1
      %s42 = scalar_select %p39, %s40, %s41
      %p45 = pneg %p39
      %p46 = scmp.eq.s32.totalorder %s16, 1
      %p47 = por %p45, %p46
      %p48 = scmp.ne.s32.totalorder %s40, %s43
      %p49 = scmp.eq.s32.totalorder %s16, 0
      %p50 = por %p48, %p49
      %p51 = scmp.ne.s32.totalorder %s40, %s43
      %p52 = scmp.eq.s32.totalorder %s21, 1
      %p53 = por %p51, %p52
      %p54 = scmp.ne.s32.totalorder %s43, %s44
      %p55 = scmp.eq.s32.totalorder %s21, 0
      %p56 = por %p54, %p55
      %p57 = scmp.ne.s32.totalorder %s43, %s44
      %p58 = scmp.eq.s32.totalorder %s22, 1
      %p59 = por %p57, %p58
      %p61 = scmp.ne.s32.totalorder %s44, %s60
      %p62 = scmp.eq.s32.totalorder %s22, 0
      %p63 = por %p61, %p62
      %s65 = sadd.s32 %s64, 1
      %p68 = scmp.eq.s32.totalorder %s16, 1
      %p69 = scmp.ne.s32.totalorder %s64, %s66
      %p70 = scmp.eq.s32.totalorder %s16, 0
      %p71 = por %p69, %p70
      %p72 = scmp.ne.s32.totalorder %s64, %s66
      %p73 = scmp.eq.s32.totalorder %s21, 1
      %p74 = por %p72, %p73
      %p75 = scmp.ne.s32.totalorder %s66, %s67
      %p76 = scmp.eq.s32.totalorder %s21, 0
      %p77 = por %p75, %p76
      %p78 = scmp.ne.s32.totalorder %s66, %s67
      %p79 = scmp.eq.s32.totalorder %s22, 1
      %p80 = por %p78, %p79
      %p82 = scmp.ne.s32.totalorder %s67, %s81
      %p83 = scmp.eq.s32.totalorder %s22, 0
      %p84 = por %p82, %p83
      %s86 = sadd.s32 %s85, 1
      %p89 = scmp.eq.s32.totalorder %s16, 1
      %p90 = scmp.ne.s32.totalorder %s85, %s87
      %p91 = scmp.eq.s32.totalorder %s16, 0
      %p92 = por %p90, %p91
      %p93 = scmp.ne.s32.totalorder %s85, %s87
      %p94 = scmp.eq.s32.totalorder %s21, 1
      %p95 = por %p93, %p94
      %p96 = scmp.ne.s32.totalorder %s87, %s88
      %p97 = scmp.eq.s32.totalorder %s21, 0
      %p98 = por %p96, %p97
      %p99 = scmp.ne.s32.totalorder %s87, %s88
      %p100 = scmp.eq.s32.totalorder %s22, 1
      %p101 = por %p99, %p100
      %p103 = scmp.ne.s32.totalorder %s88, %s102
      %p104 = scmp.eq.s32.totalorder %s22, 0
      %p105 = por %p103, %p104
      %s106 = ssub.s32 %s23, %s35
      %p107 = scmp.eq.s32.totalorder %s106, 0
      %s109 = sadd.s32 %s108, 1
      %s110 = scalar_select %p107, %s108, %s109
      %p113 = pneg %p107
      %p114 = scmp.eq.s32.totalorder %s16, 1
      %p115 = por %p113, %p114
      %p116 = scmp.ne.s32.totalorder %s108, %s111
      %p117 = scmp.eq.s32.totalorder %s16, 0
      %p118 = por %p116, %p117
      %p119 = scmp.ne.s32.totalorder %s108, %s111
      %p120 = scmp.eq.s32.totalorder %s21, 1
      %p121 = por %p119, %p120
      %p122 = scmp.ne.s32.totalorder %s111, %s112
      %p123 = scmp.eq.s32.totalorder %s21, 0
      %p124 = por %p122, %p123
      %p125 = scmp.ne.s32.totalorder %s111, %s112
      %p126 = scmp.eq.s32.totalorder %s22, 1
      %p127 = por %p125, %p126
      %p129 = scmp.ne.s32.totalorder %s112, %s128
      %p130 = scmp.eq.s32.totalorder %s22, 0
      %p131 = por %p129, %p130
      %p132 = scmp.le.s32.totalorder 1, %s16
      %p133 = scmp.lt.s32.totalorder %s16, 3
      %p134 = pnand %p132, %p133
      %p135 = pneg %p134
      // Predicated region
      $region9: #{tpu_custom_call.1} parent=5 // pred_check
        _
      $region10: #{tpu_custom_call.1} parent=5 // pred_check_branch
        %137 = sbr.rel (%p134) target = $region12
      $region11: #{tpu_custom_call.1} parent=5 // pred_region
        %s138 = ssub.s32 %s16, 1
        // Predicated region
        $region13: #{tpu_custom_call.1} parent=11 // pred_check
          %p139 = pneg %p77
        $region14: #{tpu_custom_call.1} parent=11 // pred_check_branch
          %141 = sbr.rel (%p139) target = $region16
        $region15: #{tpu_custom_call.1} parent=11 // pred_region
          %s143 = ssub.s32 64, 64
          %144 = vsyncadd [#allocation8], %s143
          %s146 = sshll.u32 [#allocation7], 4
          %s147 = int_to_ptr.vmem [resolvable:$true] %s146
          %149 = dma.hbm_to_vmem [thread:$0]  %s1, 64, %s147, [#allocation8]
        $region16: #{tpu_custom_call.1} parent=11 // pred_fallthru
          _
        // Predicated region
        $region17: #{tpu_custom_call.1} parent=11 // pred_check
          %p150 = pneg %p98
        $region18: #{tpu_custom_call.1} parent=11 // pred_check_branch
          %152 = sbr.rel (%p150) target = $region20
        $region19: #{tpu_custom_call.1} parent=11 // pred_region
          %s154 = ssub.s32 64, 64
          %155 = vsyncadd [#allocation8], %s154
          %s157 = sshll.u32 [#allocation9], 4
          %s158 = int_to_ptr.vmem [resolvable:$true] %s157
          %160 = dma.hbm_to_vmem [thread:$0]  %s2, 64, %s158, [#allocation8]
        $region20: #{tpu_custom_call.1} parent=11 // pred_fallthru
          _
      $region12: #{tpu_custom_call.1} parent=5 // pred_fallthru
        _
      %p161 = scmp.lt.s32.totalorder %s16, 2
      // Predicated region
      $region21: #{tpu_custom_call.1} parent=5 // pred_check
        %p162 = pneg %p161
      $region22: #{tpu_custom_call.1} parent=5 // pred_check_branch
        %164 = sbr.rel (%p162) target = $region24
      $region23: #{tpu_custom_call.1} parent=5 // pred_region
        // Predicated region
        $region25: #{tpu_custom_call.1} parent=23 // pred_check
          %p165 = pneg %p50
        $region26: #{tpu_custom_call.1} parent=23 // pred_check_branch
          %167 = sbr.rel (%p165) target = $region28
        $region27: #{tpu_custom_call.1} parent=23 // pred_region
          %s168 = sand.u32 %s40, 1
          %s169 = scalar_lea.sflag [#allocation5], %s168
          %s170 = sand.u32 %s40, 1
          %s171 = smul.addr %s170, 8
          %s172 = scalar_lea.vmem [#allocation4], %s171
          %s173 = smul.u32 2, %s24
          %s175 = ssub.s32 128, 128
          %176 = vsyncadd %s169, %s175
          %s177 = smul.addr %s23, 2
          %s178 = sadd.s32 %s173, %s177
          %s179 = smul.addr %s178, 64
          %s180 = scalar_lea.hbm %s0, %s179
          %s182 = sshll.u32 %s172, 4
          %s183 = int_to_ptr.vmem [resolvable:$true] %s182
          %185 = dma.hbm_to_vmem [thread:$0]  %s180, 128, %s183, %s169
        $region28: #{tpu_custom_call.1} parent=23 // pred_fallthru
          _
      $region24: #{tpu_custom_call.1} parent=5 // pred_fallthru
        _
      %p186 = scmp.le.s32.totalorder 1, %s16
      %p187 = scmp.lt.s32.totalorder %s16, 3
      %p188 = pnand %p186, %p187
      %p189 = pneg %p188
      // Predicated region
      $region29: #{tpu_custom_call.1} parent=5 // pred_check
        _
      $region30: #{tpu_custom_call.1} parent=5 // pred_check_branch
        %191 = sbr.rel (%p188) target = $region32
      $region31: #{tpu_custom_call.1} parent=5 // pred_region
        %s192 = ssub.s32 %s16, 1
        %s193 = sand.u32 %s43, 1
        %s194 = scalar_lea.sflag [#allocation5], %s193
        %s195 = sand.u32 %s43, 1
        %s196 = smul.addr %s195, 8
        %s197 = scalar_lea.vmem [#allocation4], %s196
        // Predicated region
        $region33: #{tpu_custom_call.1} parent=31 // pred_check
          %p198 = pneg %p56
        $region34: #{tpu_custom_call.1} parent=31 // pred_check_branch
          %200 = sbr.rel (%p198) target = $region36
        $region35: #{tpu_custom_call.1} parent=31 // pred_region
          %201 = dma.done %s194, 128
        $region36: #{tpu_custom_call.1} parent=31 // pred_fallthru
          _
        // Predicated region
        $region37: #{tpu_custom_call.1} parent=31 // pred_check
          %p202 = pneg %p77
        $region38: #{tpu_custom_call.1} parent=31 // pred_check_branch
          %204 = sbr.rel (%p202) target = $region40
        $region39: #{tpu_custom_call.1} parent=31 // pred_region
          %205 = dma.done [#allocation8], 64
        $region40: #{tpu_custom_call.1} parent=31 // pred_fallthru
          _
        // Predicated region
        $region41: #{tpu_custom_call.1} parent=31 // pred_check
          %p206 = pneg %p98
        $region42: #{tpu_custom_call.1} parent=31 // pred_check_branch
          %208 = sbr.rel (%p206) target = $region44
        $region43: #{tpu_custom_call.1} parent=31 // pred_region
          %209 = dma.done [#allocation8], 64
        $region44: #{tpu_custom_call.1} parent=31 // pred_fallthru
          _
        %s210 = sand.u32 %s43, 1
        %s211 = scalar_lea.sflag [#allocation5], %s210
        %s212 = sand.u32 %s43, 1
        %s213 = smul.addr %s212, 8
        %s214 = scalar_lea.vmem [#allocation4], %s213
        %p215 = pneg %p56
        %p216 = pneg %p53
        %p217 = pneg %p77
        %p218 = pneg %p74
        %p219 = pneg %p98
        %p220 = pneg %p95
        %p221 = pneg %p124
        %p222 = pneg %p121
        %s223 = sand.u32 %s111, 1
        %s224 = scalar_lea.sflag [#allocation6], %s223
        %s225 = sand.u32 %s111, 1
        %s226 = scalar_lea.vmem [#allocation10], %s225
        %s227 = smul.u32 2, %s26
        %p228 = scmp.eq.s32.totalorder %s26, 0
        // Predicated region
        $region45: #{tpu_custom_call.1} parent=31 // pred_check
          %p229 = pneg %p228
        $region46: #{tpu_custom_call.1} parent=31 // pred_check_branch
          %231 = sbr.rel (%p229) target = $region48
        $region47: #{tpu_custom_call.1} parent=31 // pred_region
          %232 = vst [vmem:[#allocation2] sm:$0xf] 0.0
          %233 = vst [vmem:[#allocation3] sm:$0xf] -inf
        $region48: #{tpu_custom_call.1} parent=31 // pred_fallthru
          _
        %v234 = vld [vmem:[%s197] sm:$0xf]
        %v235 = vld [vmem:[#allocation2] sm:$0xf]
        %v236 = vadd.f32 %v235, %v234
        %237 = vst [vmem:[#allocation2] sm:$0xf] %v236
        %v238 = vld [vmem:[#allocation3] sm:$0xf]
        %v239 = vmax.f32 %v238, %v234
        %240 = vst [vmem:[#allocation3] sm:$0xf] %v239
        %v241 = vld [vmem:[%s197 + $0x4] sm:$0xf]
        %v242 = vld [vmem:[#allocation2] sm:$0xf]
        %v243 = vadd.f32 %v242, %v241
        %244 = vst [vmem:[#allocation2] sm:$0xf] %v243
        %v245 = vld [vmem:[#allocation3] sm:$0xf]
        %v246 = vmax.f32 %v245, %v241
        %247 = vst [vmem:[#allocation3] sm:$0xf] %v246
        // Predicated region
        $region49: #{tpu_custom_call.1} parent=31 // pred_check
          %p248 = pneg %p228
        $region50: #{tpu_custom_call.1} parent=31 // pred_check_branch
          %250 = sbr.rel (%p248) target = $region52
        $region51: #{tpu_custom_call.1} parent=31 // pred_region
          %v251 = vld [vmem:[#allocation2] sm:$0xf]
          %vm252 = vcmask 1043456
          %v253 = vsel %vm252, %v251, 0.0
          %254 = vadd.xlane.f32.xlu0 %v253
          %v255 = vpop.xlane.xlu0 %254
          %v256 = vmul.f32 %v255, 0.00390625
          %v257 = vld [vmem:[#allocation3] sm:$0xf]
          %v258 = vsel %vm252, %v257, -inf
          %259 = vmax.xlane.f32.xlu0 %v258
          %v260 = vpop.xlane.xlu0 %259
          %v261 = vld [vmem:[#allocation7] sm:$0xf]
          %v262 = vld [vmem:[#allocation9] sm:$0xf]
          %v264 = vlaneseq
          %v265 = vand.u32 %v264, 127
          %v266 = vlaneseq
          %v267 = vshrl.u32 %v266, 7
          %v268 = vsub.s32 %v265, %v267
          %v269 = vrot.slane %v256, %v268
          %vm270 = vcmask 31744
          %v271 = vsel %vm270, %v269, 0
          %v274 = vsel %vm252, %v261, 0
          %276 = vmatprep.subr.mxu0 0.0
          %277 = vmatpush1.msra.mxu0 0.0
          %278 = vmatprep.subr.mxu0 0.0
          %279 = vmatpush1.msra.mxu0 0.0
          %280 = vmatprep.subr.mxu0 0.0
          %281 = vmatpush1.msra.mxu0 0.0
          %282 = vmatprep.subr.mxu0 0.0
          %283 = vmatpush1.msra.mxu0 0.0
          %284 = vmatprep.subr.mxu0 0.0
          %285 = vmatpush1.msra.mxu0 0.0
          %286 = vmatprep.subr.mxu0 0.0
          %287 = vmatpush1.msra.mxu0 0.0
          %288 = vmatprep.subr.mxu0 0.0
          %289 = vmatpush1.msra.mxu0 0.0
          %290 = vmatprep.subr.mxu0 0.0
          %291 = vmatpush1.msra.mxu0 0.0
          %292 = vmatprep.subr.mxu0 0.0
          %293 = vmatpush1.msra.mxu0 0.0
          %294 = vmatprep.subr.mxu0 0.0
          %295 = vmatpush1.msra.mxu0 0.0
          %296 = vmatprep.subr.mxu0 0.0
          %297 = vmatpush1.msra.mxu0 0.0
          %298 = vmatprep.subr.mxu0 0.0
          %299 = vmatpush1.msra.mxu0 0.0
          %300 = vmatprep.subr.mxu0 0.0
          %301 = vmatpush1.msra.mxu0 0.0
          %302 = vmatprep.subr.mxu0 0.0
          %303 = vmatpush1.msra.mxu0 0.0
          %304 = vmatprep.subr.mxu0 0.0
          %305 = vmatpush1.msra.mxu0 0.0
          %306 = vmatprep.subr.mxu0 0.0
          %307 = vmatpush1.msra.mxu0 %v274
          %308 = vmatprep.subr.mxu0 0.0
          %309 = vmatpush2.msra.mxu0 0.0
          %310 = vmatprep.subr.mxu0 0.0
          %311 = vmatpush2.msra.mxu0 0.0
          %312 = vmatprep.subr.mxu0 0.0
          %313 = vmatpush2.msra.mxu0 0.0
          %314 = vmatprep.subr.mxu0 0.0
          %315 = vmatpush2.msra.mxu0 0.0
          %316 = vmatprep.subr.mxu0 0.0
          %317 = vmatpush2.msra.mxu0 0.0
          %318 = vmatprep.subr.mxu0 0.0
          %319 = vmatpush2.msra.mxu0 0.0
          %320 = vmatprep.subr.mxu0 0.0
          %321 = vmatpush2.msra.mxu0 0.0
          %322 = vmatprep.subr.mxu0 0.0
          %323 = vmatpush2.msra.mxu0 0.0
          %324 = vmatprep.subr.mxu0 0.0
          %325 = vmatpush2.msra.mxu0 0.0
          %326 = vmatprep.subr.mxu0 0.0
          %327 = vmatpush2.msra.mxu0 0.0
          %328 = vmatprep.subr.mxu0 0.0
          %329 = vmatpush2.msra.mxu0 0.0
          %330 = vmatprep.subr.mxu0 0.0
          %331 = vmatpush2.msra.mxu0 0.0
          %332 = vmatprep.subr.mxu0 0.0
          %333 = vmatpush2.msra.mxu0 0.0
          %334 = vmatprep.subr.mxu0 0.0
          %335 = vmatpush2.msra.mxu0 0.0
          %336 = vmatprep.subr.mxu0 0.0
          %337 = vmatpush2.msra.mxu0 0.0
          %338 = vmatprep.subr.mxu0 0.0
          %339 = vmatpush2.msra.mxu0 0.0
          %340 = vmatprep.mubr.f32.mxu0 0.0
          %341 = vmatmul.mubr.f32.gmra.mxu0 %v271
          %v342 = vpop.f32.mrf.mxu0
          %v343 = vadd.f32 0.0, %v342
          %v344 = vpop.f32.mrf.mxu0
          %345 = vdwg.mxu0
          %v346 = vmax.f32 %v343, 0.0
          %v348 = vlaneseq
          %v349 = vshrl.u32 %v348, 7
          %v350 = vsub.s32 %v265, %v349
          %v351 = vrot.slane %v260, %v350
          %v352 = vsel %vm270, %v351, 0
          %354 = vmatprep.subr.mxu0 0.0
          %355 = vmatpush1.msra.mxu0 0.0
          %356 = vmatprep.subr.mxu0 0.0
          %357 = vmatpush1.msra.mxu0 0.0
          %358 = vmatprep.subr.mxu0 0.0
          %359 = vmatpush1.msra.mxu0 0.0
          %360 = vmatprep.subr.mxu0 0.0
          %361 = vmatpush1.msra.mxu0 0.0
          %362 = vmatprep.subr.mxu0 0.0
          %363 = vmatpush1.msra.mxu0 0.0
          %364 = vmatprep.subr.mxu0 0.0
          %365 = vmatpush1.msra.mxu0 0.0
          %366 = vmatprep.subr.mxu0 0.0
          %367 = vmatpush1.msra.mxu0 0.0
          %368 = vmatprep.subr.mxu0 0.0
          %369 = vmatpush1.msra.mxu0 0.0
          %370 = vmatprep.subr.mxu0 0.0
          %371 = vmatpush1.msra.mxu0 0.0
          %372 = vmatprep.subr.mxu0 0.0
          %373 = vmatpush1.msra.mxu0 0.0
          %374 = vmatprep.subr.mxu0 0.0
          %375 = vmatpush1.msra.mxu0 0.0
          %376 = vmatprep.subr.mxu0 0.0
          %377 = vmatpush1.msra.mxu0 0.0
          %378 = vmatprep.subr.mxu0 0.0
          %379 = vmatpush1.msra.mxu0 0.0
          %380 = vmatprep.subr.mxu0 0.0
          %381 = vmatpush1.msra.mxu0 0.0
          %382 = vmatprep.subr.mxu0 0.0
          %383 = vmatpush1.msra.mxu0 0.0
          %384 = vmatprep.subr.mxu0 0.0
          %385 = vmatpush1.msra.mxu0 %v274
          %386 = vmatprep.subr.mxu0 0.0
          %387 = vmatpush2.msra.mxu0 0.0
          %388 = vmatprep.subr.mxu0 0.0
          %389 = vmatpush2.msra.mxu0 0.0
          %390 = vmatprep.subr.mxu0 0.0
          %391 = vmatpush2.msra.mxu0 0.0
          %392 = vmatprep.subr.mxu0 0.0
          %393 = vmatpush2.msra.mxu0 0.0
          %394 = vmatprep.subr.mxu0 0.0
          %395 = vmatpush2.msra.mxu0 0.0
          %396 = vmatprep.subr.mxu0 0.0
          %397 = vmatpush2.msra.mxu0 0.0
          %398 = vmatprep.subr.mxu0 0.0
          %399 = vmatpush2.msra.mxu0 0.0
          %400 = vmatprep.subr.mxu0 0.0
          %401 = vmatpush2.msra.mxu0 0.0
          %402 = vmatprep.subr.mxu0 0.0
          %403 = vmatpush2.msra.mxu0 0.0
          %404 = vmatprep.subr.mxu0 0.0
          %405 = vmatpush2.msra.mxu0 0.0
          %406 = vmatprep.subr.mxu0 0.0
          %407 = vmatpush2.msra.mxu0 0.0
          %408 = vmatprep.subr.mxu0 0.0
          %409 = vmatpush2.msra.mxu0 0.0
          %410 = vmatprep.subr.mxu0 0.0
          %411 = vmatpush2.msra.mxu0 0.0
          %412 = vmatprep.subr.mxu0 0.0
          %413 = vmatpush2.msra.mxu0 0.0
          %414 = vmatprep.subr.mxu0 0.0
          %415 = vmatpush2.msra.mxu0 0.0
          %416 = vmatprep.subr.mxu0 0.0
          %417 = vmatpush2.msra.mxu0 0.0
          %418 = vmatprep.mubr.f32.mxu0 0.0
          %419 = vmatmul.mubr.f32.gmra.mxu0 %v352
          %v420 = vpop.f32.mrf.mxu0
          %v421 = vadd.f32 0.0, %v420
          %v422 = vpop.f32.mrf.mxu0
          %423 = vdwg.mxu0
          %v424 = vmax.f32 %v421, 0.0
          %v426 = vsel %vm270, %v424, 0
          %v429 = vsel %vm252, %v262, 0
          %431 = vmatprep.subr.mxu0 0.0
          %432 = vmatpush1.msra.mxu0 0.0
          %433 = vmatprep.subr.mxu0 0.0
          %434 = vmatpush1.msra.mxu0 0.0
          %435 = vmatprep.subr.mxu0 0.0
          %436 = vmatpush1.msra.mxu0 0.0
          %437 = vmatprep.subr.mxu0 0.0
          %438 = vmatpush1.msra.mxu0 0.0
          %439 = vmatprep.subr.mxu0 0.0
          %440 = vmatpush1.msra.mxu0 0.0
          %441 = vmatprep.subr.mxu0 0.0
          %442 = vmatpush1.msra.mxu0 0.0
          %443 = vmatprep.subr.mxu0 0.0
          %444 = vmatpush1.msra.mxu0 0.0
          %445 = vmatprep.subr.mxu0 0.0
          %446 = vmatpush1.msra.mxu0 0.0
          %447 = vmatprep.subr.mxu0 0.0
          %448 = vmatpush1.msra.mxu0 0.0
          %449 = vmatprep.subr.mxu0 0.0
          %450 = vmatpush1.msra.mxu0 0.0
          %451 = vmatprep.subr.mxu0 0.0
          %452 = vmatpush1.msra.mxu0 0.0
          %453 = vmatprep.subr.mxu0 0.0
          %454 = vmatpush1.msra.mxu0 0.0
          %455 = vmatprep.subr.mxu0 0.0
          %456 = vmatpush1.msra.mxu0 0.0
          %457 = vmatprep.subr.mxu0 0.0
          %458 = vmatpush1.msra.mxu0 0.0
          %459 = vmatprep.subr.mxu0 0.0
          %460 = vmatpush1.msra.mxu0 0.0
          %461 = vmatprep.subr.mxu0 0.0
          %462 = vmatpush1.msra.mxu0 %v429
          %463 = vmatprep.subr.mxu0 0.0
          %464 = vmatpush2.msra.mxu0 0.0
          %465 = vmatprep.subr.mxu0 0.0
          %466 = vmatpush2.msra.mxu0 0.0
          %467 = vmatprep.subr.mxu0 0.0
          %468 = vmatpush2.msra.mxu0 0.0
          %469 = vmatprep.subr.mxu0 0.0
          %470 = vmatpush2.msra.mxu0 0.0
          %471 = vmatprep.subr.mxu0 0.0
          %472 = vmatpush2.msra.mxu0 0.0
          %473 = vmatprep.subr.mxu0 0.0
          %474 = vmatpush2.msra.mxu0 0.0
          %475 = vmatprep.subr.mxu0 0.0
          %476 = vmatpush2.msra.mxu0 0.0
          %477 = vmatprep.subr.mxu0 0.0
          %478 = vmatpush2.msra.mxu0 0.0
          %479 = vmatprep.subr.mxu0 0.0
          %480 = vmatpush2.msra.mxu0 0.0
          %481 = vmatprep.subr.mxu0 0.0
          %482 = vmatpush2.msra.mxu0 0.0
          %483 = vmatprep.subr.mxu0 0.0
          %484 = vmatpush2.msra.mxu0 0.0
          %485 = vmatprep.subr.mxu0 0.0
          %486 = vmatpush2.msra.mxu0 0.0
          %487 = vmatprep.subr.mxu0 0.0
          %488 = vmatpush2.msra.mxu0 0.0
          %489 = vmatprep.subr.mxu0 0.0
          %490 = vmatpush2.msra.mxu0 0.0
          %491 = vmatprep.subr.mxu0 0.0
          %492 = vmatpush2.msra.mxu0 0.0
          %493 = vmatprep.subr.mxu0 0.0
          %494 = vmatpush2.msra.mxu0 0.0
          %495 = vmatprep.mubr.f32.mxu0 0.0
          %496 = vmatmul.mubr.f32.gmra.mxu0 %v426
          %v497 = vpop.f32.mrf.mxu0
          %v498 = vadd.f32 0.0, %v497
          %v499 = vpop.f32.mrf.mxu0
          %500 = vdwg.mxu0
          %v502 = vsel %vm270, %v346, 0
          %504 = vmatprep.subr.mxu0 0.0
          %505 = vmatpush1.msra.mxu0 0.0
          %506 = vmatprep.subr.mxu0 0.0
          %507 = vmatpush1.msra.mxu0 0.0
          %508 = vmatprep.subr.mxu0 0.0
          %509 = vmatpush1.msra.mxu0 0.0
          %510 = vmatprep.subr.mxu0 0.0
          %511 = vmatpush1.msra.mxu0 0.0
          %512 = vmatprep.subr.mxu0 0.0
          %513 = vmatpush1.msra.mxu0 0.0
          %514 = vmatprep.subr.mxu0 0.0
          %515 = vmatpush1.msra.mxu0 0.0
          %516 = vmatprep.subr.mxu0 0.0
          %517 = vmatpush1.msra.mxu0 0.0
          %518 = vmatprep.subr.mxu0 0.0
          %519 = vmatpush1.msra.mxu0 0.0
          %520 = vmatprep.subr.mxu0 0.0
          %521 = vmatpush1.msra.mxu0 0.0
          %522 = vmatprep.subr.mxu0 0.0
          %523 = vmatpush1.msra.mxu0 0.0
          %524 = vmatprep.subr.mxu0 0.0
          %525 = vmatpush1.msra.mxu0 0.0
          %526 = vmatprep.subr.mxu0 0.0
          %527 = vmatpush1.msra.mxu0 0.0
          %528 = vmatprep.subr.mxu0 0.0
          %529 = vmatpush1.msra.mxu0 0.0
          %530 = vmatprep.subr.mxu0 0.0
          %531 = vmatpush1.msra.mxu0 0.0
          %532 = vmatprep.subr.mxu0 0.0
          %533 = vmatpush1.msra.mxu0 0.0
          %534 = vmatprep.subr.mxu0 0.0
          %535 = vmatpush1.msra.mxu0 %v429
          %536 = vmatprep.subr.mxu0 0.0
          %537 = vmatpush2.msra.mxu0 0.0
          %538 = vmatprep.subr.mxu0 0.0
          %539 = vmatpush2.msra.mxu0 0.0
          %540 = vmatprep.subr.mxu0 0.0
          %541 = vmatpush2.msra.mxu0 0.0
          %542 = vmatprep.subr.mxu0 0.0
          %543 = vmatpush2.msra.mxu0 0.0
          %544 = vmatprep.subr.mxu0 0.0
          %545 = vmatpush2.msra.mxu0 0.0
          %546 = vmatprep.subr.mxu0 0.0
          %547 = vmatpush2.msra.mxu0 0.0
          %548 = vmatprep.subr.mxu0 0.0
          %549 = vmatpush2.msra.mxu0 0.0
          %550 = vmatprep.subr.mxu0 0.0
          %551 = vmatpush2.msra.mxu0 0.0
          %552 = vmatprep.subr.mxu0 0.0
          %553 = vmatpush2.msra.mxu0 0.0
          %554 = vmatprep.subr.mxu0 0.0
          %555 = vmatpush2.msra.mxu0 0.0
          %556 = vmatprep.subr.mxu0 0.0
          %557 = vmatpush2.msra.mxu0 0.0
          %558 = vmatprep.subr.mxu0 0.0
          %559 = vmatpush2.msra.mxu0 0.0
          %560 = vmatprep.subr.mxu0 0.0
          %561 = vmatpush2.msra.mxu0 0.0
          %562 = vmatprep.subr.mxu0 0.0
          %563 = vmatpush2.msra.mxu0 0.0
          %564 = vmatprep.subr.mxu0 0.0
          %565 = vmatpush2.msra.mxu0 0.0
          %566 = vmatprep.subr.mxu0 0.0
          %567 = vmatpush2.msra.mxu0 0.0
          %568 = vmatprep.mubr.f32.mxu0 0.0
          %569 = vmatmul.mubr.f32.gmra.mxu0 %v502
          %v570 = vpop.f32.mrf.mxu0
          %v571 = vadd.f32 %v498, %v570
          %v572 = vpop.f32.mrf.mxu0
          %573 = vdwg.mxu0
          %v574 = vxor.u32 %v571, 2147483648
          %v575 = vmul.f32 %v574, 1.442695
          %v576 = vpow.pop %v575
          %v577 = vadd.f32 %v576, 1.0
          %v578 = vrcp.pop %v577
          %v579 = vmul.f32 1.0, %v578
          %vm580 = vcmask 24576
          %581 = vst.msk [vmem:[%s226] sm:$0x1] %vm580, %v579
        $region52: #{tpu_custom_call.1} parent=31 // pred_fallthru
          _
        %s582 = sand.u32 %s111, 1
        %s583 = scalar_lea.sflag [#allocation6], %s582
        %s584 = sand.u32 %s111, 1
        %s585 = scalar_lea.vmem [#allocation10], %s584
        // Predicated region
        $region53: #{tpu_custom_call.1} parent=31 // pred_check
          %p586 = pneg %p121
        $region54: #{tpu_custom_call.1} parent=31 // pred_check_branch
          %588 = sbr.rel (%p586) target = $region56
        $region55: #{tpu_custom_call.1} parent=31 // pred_region
          %s590 = ssub.s32 16, 16
          %591 = vsyncadd %s583, %s590
          %s592 = smul.addr %s25, 16
          %s593 = scalar_lea.hbm %s3, %s592
          %s595 = sshll.u32 %s585, 4
          %s596 = int_to_ptr.vmem [resolvable:$true] %s595
          %598 = dma.vmem_to_hbm [thread:$0]  %s596, 16, %s593, %s583
        $region56: #{tpu_custom_call.1} parent=31 // pred_fallthru
          _
      $region32: #{tpu_custom_call.1} parent=5 // pred_fallthru
        _
      %p599 = scmp.le.s32.totalorder 2, %s16
      // Predicated region
      $region57: #{tpu_custom_call.1} parent=5 // pred_check
        %p600 = pneg %p599
      $region58: #{tpu_custom_call.1} parent=5 // pred_check_branch
        %602 = sbr.rel (%p600) target = $region60
      $region59: #{tpu_custom_call.1} parent=5 // pred_region
        %s603 = ssub.s32 %s16, 2
        // Predicated region
        $region61: #{tpu_custom_call.1} parent=59 // pred_check
          %p604 = pneg %p127
        $region62: #{tpu_custom_call.1} parent=59 // pred_check_branch
          %606 = sbr.rel (%p604) target = $region64
        $region63: #{tpu_custom_call.1} parent=59 // pred_region
          %s607 = sand.u32 %s112, 1
          %s608 = scalar_lea.sflag [#allocation6], %s607
          %s609 = sand.u32 %s112, 1
          %s610 = scalar_lea.vmem [#allocation10], %s609
          %611 = dma.done %s608, 16
        $region64: #{tpu_custom_call.1} parent=59 // pred_fallthru
          _
      $region60: #{tpu_custom_call.1} parent=5 // pred_fallthru
        _
    $region6: #{tpu_custom_call.1} parent=1 // loop_footer
      %s20 = sadd.s32 1, %s16
    $region7: #{tpu_custom_call.1} parent=1 // loop_footer_branch
      %15 = sbr.rel target = $region3
    $region8: #{tpu_custom_call.1} parent=1 // loop_exit
      _
    %612 = vsyncpa [#allocation5], 1
    %s613 = scalar_lea.sflag [#allocation5], 1
    %614 = vsyncpa %s613, 1
    %615 = vsyncpa [#allocation8], 1
    %616 = vsyncpa [#allocation6], 1
    %s617 = scalar_lea.sflag [#allocation6], 1
    %618 = vsyncpa %s617, 1

</llo_original>
